<compile_context>
chip_gen: v6e
topology: v6e:2x2x1
jax: 0.10.0
libtpu: 0.0.40
codegen_flags: <defaults>
</compile_context>

<pallas_src>
import functools

import jax
import jax.numpy as jnp
from jax import lax
from jax.experimental import pallas as pl
from jax.experimental.pallas import tpu as pltpu


_VMEM_LIMIT_BYTES = 48 * 1024 * 1024   # explicit scoped-VMEM budget (<= v7x 64 MiB physical)
_VMEM_FILL_FRACTION = 0.7              # leave headroom for Mosaic temps / output blocks


def _mnr_kernel(a_ref, tgt_ref, c_ref, out_ref, m_sc, l_sc, *,
                c_valid: int, mask_cols: bool):
    """One (anchor-tile i, candidate-tile j) step of an online-softmax CE loss.

    a_ref  : (tb, D)  L2-normalized anchors, pre-scaled by `scale`
    tgt_ref: (tb, 1)  precomputed target logit  <scale*a_nrm_i, p_nrm_i>  (f32)
    c_ref  : (tc, D)  L2-normalized candidate tile
    out_ref: (tb, 1)  per-anchor loss, written on the last candidate tile
    m_sc, l_sc : (tb, 1) f32 running max / running sum-exp scratch
    """
    j = pl.program_id(1)

    @pl.when(j == 0)
    def _():
        m_sc[...] = jnp.full_like(m_sc, -jnp.inf)
        l_sc[...] = jnp.zeros_like(l_sc)

    # Score tile (tb, tc) on the MXU, f32 accumulation.
    s = lax.dot_general(
        a_ref[...], c_ref[...],
        dimension_numbers=(((1,), (1,)), ((), ())),
        preferred_element_type=jnp.float32)

    if mask_cols:
        # Cheap mask: (1, tc) bias row broadcast over sublanes.  Only the last
        # candidate tile can contain padding, and it always contains at least
        # one valid column (padding < tc by construction), so m_new stays finite.
        tc_sz = s.shape[1]
        col = j * tc_sz + lax.broadcasted_iota(jnp.int32, (1, tc_sz), 1)
        s = s + jnp.where(col < c_valid, 0.0, -1e30).astype(jnp.float32)

    m_prev = m_sc[...]
    m_new = jnp.maximum(m_prev, jnp.max(s, axis=-1, keepdims=True))
    l_sc[...] = (l_sc[...] * jnp.exp(m_prev - m_new)
                 + jnp.sum(jnp.exp(s - m_new), axis=-1, keepdims=True))
    m_sc[...] = m_new

    @pl.when(j == pl.num_programs(1) - 1)
    def _():
        # Target logit already participates in the logsumexp via the first B
        # candidate columns; here we only subtract it.
        out_ref[...] = m_sc[...] + jnp.log(l_sc[...]) - tgt_ref[...]


def _round_up(x: int, m: int) -> int:
    return ((x + m - 1) // m) * m


def _choose_tiles(B: int, C: int, D_pad: int, dtype_bytes: int):
    """Derive (tb, tc) from problem size, dtype, and the VMEM budget."""
    usable = int(_VMEM_LIMIT_BYTES * _VMEM_FILL_FRACTION)

    # tb sets arithmetic intensity on the re-streamed candidate stream
    # (~tb FLOPs/byte); aim above the MXU/HBM knee.  tc mostly amortizes the
    # ~0.35 us per-grid-step overhead.
    tb = 512 if dtype_bytes <= 2 else 384
    tc = 1024 if dtype_bytes <= 2 else 512

    tb = min(tb, _round_up(B, 8))
    tc = min(tc, _round_up(C, 128))

    # v7x has 2 TensorCores: guarantee >= 2 tiles on the "parallel" anchor axis.
    while tb > 8 and _round_up(B, tb) // tb < 2:
        tb = _round_up(max(8, tb // 2), 8)

    def usage(tb_, tc_):
        # Double-buffered anchor + candidate blocks dominate VMEM use; the
        # (tb,1) target/output blocks and scratch are negligible.
        return 2 * dtype_bytes * D_pad * (tb_ + tc_)

    # Shrink tc first (it only amortizes step overhead), then tb.
    while usage(tb, tc) > usable and tc > 128:
        tc = _round_up(max(128, tc // 2), 128)
    while usage(tb, tc) > usable and tb > 8:
        tb = _round_up(max(8, tb // 2), 8)
    return tb, tc


def mnr_loss(anchor_embs, pos_embs, neg_embs, scale: float = 20.0,
             tb: int | None = None, tc: int | None = None,
             compute_dtype=None):
    """Pallas TPU CustomMultipleNegativesRankingLoss.forward."""
    B, D = anchor_embs.shape
    N = neg_embs.shape[0]
    C = B + N
    eps = 1e-12  # matches torch.nn.functional.normalize default

    # MXU operand dtype: keep bf16 if upstream is bf16, else f32.  Callers may
    # force bf16 on an f32 pipeline when their tolerance allows (roughly 2x
    # less HBM traffic + much higher MXU rate on v6e/v7x).
    if compute_dtype is None:
        compute_dtype = (jnp.bfloat16 if anchor_embs.dtype == jnp.bfloat16
                         else jnp.float32)
    dtype_bytes = jnp.dtype(compute_dtype).itemsize

    def _norm(x):
        x32 = x.astype(jnp.float32)
        ss = jnp.sum(x32 * x32, axis=-1, keepdims=True)
        return x32 * lax.rsqrt(jnp.maximum(ss, eps * eps))   # == x / max(||x||, eps)

    # Normalize once (HBM pass), fold `scale` into the anchors so the kernel
    # never touches the (tb, tc) score tile with a VPU multiply.
    a_n = (_norm(anchor_embs) * jnp.float32(scale)).astype(compute_dtype)   # (B, D)
    p_n = _norm(pos_embs).astype(compute_dtype)                             # (B, D)
    n_n = _norm(neg_embs).astype(compute_dtype)                             # (N, D)

    # Target logit = scale * cos(anchor_i, pos_i), computed here (fuses with
    # the normalization pass) from the same compute-dtype operands the MXU sees.
    tgt = jnp.sum(a_n.astype(jnp.float32) * p_n.astype(jnp.float32),
                  axis=-1, keepdims=True)                                   # (B, 1) f32

    cand_n = jnp.concatenate([p_n, n_n], axis=0)                            # (C, D)

    # Pad the contraction dim to full 128-lane vregs; zeros are exact for both
    # the score matmul and the (already computed) target dot.
    D_pad = _round_up(D, 128)
    if D_pad != D:
        a_n = jnp.pad(a_n, ((0, 0), (0, D_pad - D)))
        cand_n = jnp.pad(cand_n, ((0, 0), (0, D_pad - D)))

    if tb is None or tc is None:
        tb_auto, tc_auto = _choose_tiles(B, C, D_pad, dtype_bytes)
        tb = tb if tb is not None else tb_auto
        tc = tc if tc is not None else tc_auto

    B_pad = _round_up(B, tb)
    C_pad = _round_up(C, tc)

    if B_pad != B:
        a_n = jnp.pad(a_n, ((0, B_pad - B), (0, 0)))
        tgt = jnp.pad(tgt, ((0, B_pad - B), (0, 0)))
    if C_pad != C:
        cand_n = jnp.pad(cand_n, ((0, C_pad - C), (0, 0)))

    kernel = functools.partial(_mnr_kernel, c_valid=C, mask_cols=(C_pad != C))

    per_row = pl.pallas_call(
        kernel,
        out_shape=jax.ShapeDtypeStruct((B_pad, 1), jnp.float32),
        grid_spec=pltpu.PrefetchScalarGridSpec(
            num_scalar_prefetch=0,
            grid=(B_pad // tb, C_pad // tc),
            in_specs=[
                pl.BlockSpec((tb, D_pad), lambda i, j: (i, 0)),   # anchors (scaled)
                pl.BlockSpec((tb, 1), lambda i, j: (i, 0)),       # target logits
                pl.BlockSpec((tc, D_pad), lambda i, j: (j, 0)),   # candidate tile
            ],
            out_specs=pl.BlockSpec((tb, 1), lambda i, j: (i, 0)),
            scratch_shapes=[
                pltpu.VMEM((tb, 1), jnp.float32),   # running max
                pltpu.VMEM((tb, 1), jnp.float32),   # running sum-exp
            ],
        ),
        compiler_params=pltpu.CompilerParams(
            dimension_semantics=("parallel", "arbitrary"),
            vmem_limit_bytes=_VMEM_LIMIT_BYTES),
    )(a_n, tgt, cand_n)

    # Exclude padded anchor rows from the mean.
    return jnp.sum(per_row[:B, 0]) / B


def _reference(anchor_embs, pos_embs, neg_embs, scale=20.0):
    cand = jnp.concatenate([pos_embs, neg_embs], axis=0)
    a_n = anchor_embs / jnp.maximum(
        jnp.linalg.norm(anchor_embs, axis=-1, keepdims=True), 1e-12)
    c_n = cand / jnp.maximum(
        jnp.linalg.norm(cand, axis=-1, keepdims=True), 1e-12)
    scores = (a_n @ c_n.T) * scale
    lse = jax.nn.logsumexp(scores, axis=-1)
    diag = jnp.diagonal(scores[:, : scores.shape[0]])
    return jnp.mean(lse - diag)


if __name__ == "__main__":
    key = jax.random.PRNGKey(0)
    k_a, k_p, k_n = jax.random.split(key, 3)

    # Case 1: tile-aligned candidate count, explicit small tiles -> exercises a
    # (2, 2) grid with multi-tile online softmax and no column masking.
    B, N, D = 16, 240, 64
    anchor = jax.random.normal(k_a, (B, D), dtype=jnp.float32)
    pos = jax.random.normal(k_p, (B, D), dtype=jnp.float32)
    neg = jax.random.normal(k_n, (N, D), dtype=jnp.float32)

    loss = mnr_loss(anchor, pos, neg, scale=20.0, tb=8, tc=128)
    jax.block_until_ready(loss)
    ref = _reference(anchor, pos, neg, scale=20.0)
    assert jnp.allclose(loss, ref, atol=1e-4, rtol=1e-4), (loss, ref)

    # Case 2: small unaligned shapes (B=8, N=8, D=32), auto tiles -> exercises
    # D padding to 128 lanes + candidate-column masking.
    B2, N2, D2 = 8, 8, 32
    anchor2 = jax.random.normal(k_a, (B2, D2), dtype=jnp.float32)
    pos2 = jax.random.normal(k_p, (B2, D2), dtype=jnp.float32)
    neg2 = jax.random.normal(k_n, (N2, D2), dtype=jnp.float32)

    loss2 = mnr_loss(anchor2, pos2, neg2, scale=20.0)
    jax.block_until_ready(loss2)
    ref2 = _reference(anchor2, pos2, neg2, scale=20.0)
    assert jnp.allclose(loss2, ref2, atol=1e-4, rtol=1e-4), (loss2, ref2)

    # Case 3: bf16 path (MXU bf16 operands, f32 accumulate) with a loose
    # tolerance against the f32 reference.
    B3, N3, D3 = 16, 112, 64
    anchor3 = jax.random.normal(k_a, (B3, D3), dtype=jnp.float32)
    pos3 = jax.random.normal(k_p, (B3, D3), dtype=jnp.float32)
    neg3 = jax.random.normal(k_n, (N3, D3), dtype=jnp.float32)

    loss3 = mnr_loss(anchor3.astype(jnp.bfloat16), pos3.astype(jnp.bfloat16),
                     neg3.astype(jnp.bfloat16), scale=20.0)
    jax.block_until_ready(loss3)
    ref3 = _reference(anchor3, pos3, neg3, scale=20.0)
    assert jnp.allclose(loss3, ref3, atol=1e-1, rtol=1e-1), (loss3, ref3)

    print("KERNEL_OK")
</pallas_src>

<mosaic_0001>
module attributes {stable_mosaic.version = 11 : i64} {
  func.func @_mnr_kernel(%arg0: i32, %arg1: i32, %arg2: memref<8x128xf32, #tpu.memory_space<vmem>>, %arg3: memref<8x1xf32, #tpu.memory_space<vmem>>, %arg4: memref<128x128xf32, #tpu.memory_space<vmem>>, %arg5: memref<8x1xf32, #tpu.memory_space<vmem>>, %arg6: memref<8x1xf32, #tpu.memory_space<vmem>>, %arg7: memref<8x1xf32, #tpu.memory_space<vmem>>) attributes {dimension_semantics = [#tpu.dimension_semantics<parallel>, #tpu.dimension_semantics<arbitrary>], iteration_bounds = array<i64: 2, 2>, scalar_prefetch = 0 : i64, scratch_operands = 2 : i64, tpu.core_type = #tpu.core_type<tc>, window_params = [{transform_indices = @transform_0, window_bounds = array<i64: 8, 128>}, {transform_indices = @transform_1, window_bounds = array<i64: 8, 1>}, {transform_indices = @transform_2, window_bounds = array<i64: 128, 128>}, {transform_indices = @transform_3, window_bounds = array<i64: 8, 1>}]} {
    %c0_i32 = arith.constant 0 : i32
    %0 = arith.cmpi eq, %arg1, %c0_i32 : i32
    %1 = arith.extui %0 : i1 to i32
    %c0_i32_0 = arith.constant 0 : i32
    %2 = arith.cmpi ne, %1, %c0_i32_0 : i32
    scf.if %2 {
      %cst_15 = arith.constant 0xFF800000 : f32
      %25 = vector.broadcast %cst_15 : f32 to vector<8x1xf32>
      %c0_16 = arith.constant 0 : index
      %c0_17 = arith.constant 0 : index
      %26 = vector.load %arg6[%c0_16, %c0_17] : memref<8x1xf32, #tpu.memory_space<vmem>>, vector<8x1xf32>
      tpu.vector_store %arg6[%c0_16, %c0_17], %25 {strides = array<i32>} : memref<8x1xf32, #tpu.memory_space<vmem>>, vector<8x1xf32>,
      %cst_18 = arith.constant 0.000000e+00 : f32
      %27 = vector.broadcast %cst_18 : f32 to vector<8x1xf32>
      %c0_19 = arith.constant 0 : index
      %c0_20 = arith.constant 0 : index
      %28 = vector.load %arg7[%c0_19, %c0_20] : memref<8x1xf32, #tpu.memory_space<vmem>>, vector<8x1xf32>
      tpu.vector_store %arg7[%c0_19, %c0_20], %27 {strides = array<i32>} : memref<8x1xf32, #tpu.memory_space<vmem>>, vector<8x1xf32>,
    } else {
    }
    %c0 = arith.constant 0 : index
    %c0_1 = arith.constant 0 : index
    %3 = vector.load %arg2[%c0, %c0_1] : memref<8x128xf32, #tpu.memory_space<vmem>>, vector<8x128xf32>
    %c0_2 = arith.constant 0 : index
    %c0_3 = arith.constant 0 : index
    %4 = vector.load %arg4[%c0_2, %c0_3] : memref<128x128xf32, #tpu.memory_space<vmem>>, vector<128x128xf32>
    %cst = arith.constant dense<0.000000e+00> : vector<8x128xf32>
    %5 = tpu.matmul %3, %4, %cst {dimension_numbers = #tpu.dot_dimension_numbers<[1], [1], [0], [0], [0, 0, 1, 0], [], []>} : vector<8x128xf32>, vector<128x128xf32>, vector<8x128xf32> -> vector<8x128xf32>
    %c0_4 = arith.constant 0 : index
    %c0_5 = arith.constant 0 : index
    %6 = vector.load %arg6[%c0_4, %c0_5] : memref<8x1xf32, #tpu.memory_space<vmem>>, vector<8x1xf32>
    %cst_6 = arith.constant dense<0xFF800000> : vector<8xf32>
    %7 = vector.multi_reduction <maximumf>, %5, %cst_6 [1] : vector<8x128xf32> to vector<8xf32>
    %8 = vector.shape_cast %7 : vector<8xf32> to vector<8x1xf32>
    %9 = arith.maximumf %6, %8 : vector<8x1xf32>
    %c0_7 = arith.constant 0 : index
    %c0_8 = arith.constant 0 : index
    %10 = vector.load %arg7[%c0_7, %c0_8] : memref<8x1xf32, #tpu.memory_space<vmem>>, vector<8x1xf32>
    %11 = arith.subf %6, %9 : vector<8x1xf32>
    %12 = math.exp %11 : vector<8x1xf32>
    %13 = arith.mulf %10, %12 : vector<8x1xf32>
    %14 = vector.broadcast %9 : vector<8x1xf32> to vector<8x128xf32>
    %15 = arith.subf %5, %14 : vector<8x128xf32>
    %16 = math.exp %15 : vector<8x128xf32>
    %cst_9 = arith.constant dense<0.000000e+00> : vector<8xf32>
    %17 = vector.multi_reduction <add>, %16, %cst_9 [1] : vector<8x128xf32> to vector<8xf32>
    %18 = vector.shape_cast %17 : vector<8xf32> to vector<8x1xf32>
    %19 = arith.addf %13, %18 : vector<8x1xf32>
    %c0_10 = arith.constant 0 : index
    %c0_11 = arith.constant 0 : index
    %20 = vector.load %arg7[%c0_10, %c0_11] : memref<8x1xf32, #tpu.memory_space<vmem>>, vector<8x1xf32>
    tpu.vector_store %arg7[%c0_10, %c0_11], %19 {strides = array<i32>} : memref<8x1xf32, #tpu.memory_space<vmem>>, vector<8x1xf32>,
    %c0_12 = arith.constant 0 : index
    %c0_13 = arith.constant 0 : index
    %21 = vector.load %arg6[%c0_12, %c0_13] : memref<8x1xf32, #tpu.memory_space<vmem>>, vector<8x1xf32>
    tpu.vector_store %arg6[%c0_12, %c0_13], %9 {strides = array<i32>} : memref<8x1xf32, #tpu.memory_space<vmem>>, vector<8x1xf32>,
    %c1_i32 = arith.constant 1 : i32
    %22 = arith.cmpi eq, %arg1, %c1_i32 : i32
    %23 = arith.extui %22 : i1 to i32
    %c0_i32_14 = arith.constant 0 : i32
    %24 = arith.cmpi ne, %23, %c0_i32_14 : i32
    scf.if %24 {
      %c0_15 = arith.constant 0 : index
      %c0_16 = arith.constant 0 : index
      %25 = vector.load %arg6[%c0_15, %c0_16] : memref<8x1xf32, #tpu.memory_space<vmem>>, vector<8x1xf32>
      %c0_17 = arith.constant 0 : index
      %c0_18 = arith.constant 0 : index
      %26 = vector.load %arg7[%c0_17, %c0_18] : memref<8x1xf32, #tpu.memory_space<vmem>>, vector<8x1xf32>
      %27 = math.log %26 : vector<8x1xf32>
      %28 = arith.addf %25, %27 : vector<8x1xf32>
      %c0_19 = arith.constant 0 : index
      %c0_20 = arith.constant 0 : index
      %29 = vector.load %arg3[%c0_19, %c0_20] : memref<8x1xf32, #tpu.memory_space<vmem>>, vector<8x1xf32>
      %30 = arith.subf %28, %29 : vector<8x1xf32>
      %c0_21 = arith.constant 0 : index
      %c0_22 = arith.constant 0 : index
      %31 = vector.load %arg5[%c0_21, %c0_22] : memref<8x1xf32, #tpu.memory_space<vmem>>, vector<8x1xf32>
      tpu.vector_store %arg5[%c0_21, %c0_22], %30 {strides = array<i32>} : memref<8x1xf32, #tpu.memory_space<vmem>>, vector<8x1xf32>,
    } else {
    }
    return
  }
  func.func @transform_0(%arg0: i32, %arg1: i32) -> (i32, i32) {
    %c0_i32 = arith.constant 0 : i32
    %c0_i32_0 = arith.constant 0 : i32
    return %arg0, %c0_i32 : i32, i32
  }
  func.func @transform_1(%arg0: i32, %arg1: i32) -> (i32, i32) {
    %c0_i32 = arith.constant 0 : i32
    %c0_i32_0 = arith.constant 0 : i32
    return %arg0, %c0_i32 : i32, i32
  }
  func.func @transform_2(%arg0: i32, %arg1: i32) -> (i32, i32) {
    %c0_i32 = arith.constant 0 : i32
    %c0_i32_0 = arith.constant 0 : i32
    return %arg1, %c0_i32 : i32, i32
  }
  func.func @transform_3(%arg0: i32, %arg1: i32) -> (i32, i32) {
    %c0_i32 = arith.constant 0 : i32
    %c0_i32_0 = arith.constant 0 : i32
    return %arg0, %c0_i32 : i32, i32
  }
}

</mosaic_0001>

<llo_original>
// kernel: tpu_custom_call.1
$region0: #{tpu_custom_call.1}
  #allocation0 [shape = 'u32[]', space=smem, size = 0x4, offset = 0x4, fixed_abs, tag = 'smem constant byte address 0x4 - core index']
  #allocation1 [shape = 'u32[144,128]{1,0:T(1,128)}', space=vmem, size = 0x12000, scoped, tag = 'internal scratch']
  #allocation2 [shape = 'f32[8,1]{1,0:T(8,128)}', space=vmem, size = 0x1000, scoped, tag = 'scratch operand']
  #allocation3 [shape = 'f32[8,1]{1,0:T(8,128)}', space=vmem, size = 0x1000, scoped, tag = 'scratch operand']
  %s0 = inlined_call_operand.vmem [shape: f32[16,128], index: 0, kind: input, shape index: {}]
  %s1 = inlined_call_operand.vmem [shape: f32[16,1], index: 1, kind: input, shape index: {}]
  %s2 = inlined_call_operand.hbm [shape: f32[256,128], index: 2, kind: input, shape index: {}]
  %s3 = inlined_call_operand.vmem [shape: f32[16,1], index: 3, kind: output, shape index: {}]
  %s4 = sld [smem:[#allocation0]]
  $region57: #{tpu_custom_call.1} parent=0
    _
  %s6 = ssub.s32 1, %s4
  %s7 = scalar_select 0, %s6, %s4
  $region1: #{tpu_custom_call.1} parent=0
    #allocation4 [shape = 'u8[131072]{0}', space=vmem, size = 0x20000, scoped, tag = 'input window, operand 2']
    #allocation5 [shape = 's32[2]{0}', space=sflag, size = 0x8, scoped, tag = 'scoped memory for tpu_custom_call.1']
    %8 = vsyncpa [#allocation5], 0
    %s9 = scalar_lea.sflag [#allocation5], 1
    %10 = vsyncpa %s9, 0
    loop: start=0, step=1, limit=6
    $region2: #{tpu_custom_call.1} parent=1 // loop_pre_header
      _
    $region3: #{tpu_custom_call.1} parent=1 // loop_header
      %s12 = sphi 0, %s16
      %p13 = scmp.ge.s32.totalorder %s12, 6
      %s19 = sphi 0, %s31
      %s20 = sphi 0, %s27
      %s21 = sphi 0, %s19
      %s22 = sphi 0, %s20
      %s23 = sphi 0, %s21
      %s24 = sphi 0, %s22
      %s34 = sphi 0, %s36
      %s37 = sphi 0, %s34
      %s38 = sphi 0, %s37
      %s54 = sphi 0, %s38
      %s60 = sphi 0, %s62
      %s63 = sphi 0, %s60
      %s64 = sphi 0, %s63
      %s80 = sphi 0, %s64
      %s86 = sphi 0, %s88
      %s89 = sphi 0, %s86
      %s90 = sphi 0, %s89
      %s106 = sphi 0, %s90
      %s112 = sphi 0, %s114
      %s115 = sphi 0, %s112
      %s116 = sphi 0, %s115
      %s132 = sphi 0, %s116
    $region4: #{tpu_custom_call.1} parent=1 // loop_header_branch
      %15 = sbr.rel (%p13) target = $region8
    $region5: #{tpu_custom_call.1} parent=1 // loop_body
      %s17 = ssub.s32 %s12, 1
      %s18 = ssub.s32 %s12, 2
      %s25 = sadd.s32 1, %s20
      %p26 = scmp.ge.s32.totalorder %s25, 2
      %s27 = scalar_select %p26, 0, %s25
      %s28 = sadd.s32 1, %s19
      %s29 = scalar_select %p26, %s28, %s19
      %p30 = scmp.ge.s32.totalorder %s29, 2
      %s31 = scalar_select %p30, 0, %s29
      %s32 = ssub.s32 %s19, %s31
      %p33 = scmp.eq.s32.totalorder %s32, 0
      %s35 = sadd.s32 %s34, 1
      %s36 = scalar_select %p33, %s34, %s35
      %p39 = pneg %p33
      %p40 = scmp.eq.s32.totalorder %s12, 3
      %p41 = por %p39, %p40
      %p42 = scmp.ne.s32.totalorder %s34, %s37
      %p43 = scmp.eq.s32.totalorder %s12, 0
      %p44 = por %p42, %p43
      %p45 = scmp.ne.s32.totalorder %s34, %s37
      %p46 = scmp.eq.s32.totalorder %s17, 3
      %p47 = por %p45, %p46
      %p48 = scmp.ne.s32.totalorder %s37, %s38
      %p49 = scmp.eq.s32.totalorder %s17, 0
      %p50 = por %p48, %p49
      %p51 = scmp.ne.s32.totalorder %s37, %s38
      %p52 = scmp.eq.s32.totalorder %s18, 3
      %p53 = por %p51, %p52
      %p55 = scmp.ne.s32.totalorder %s38, %s54
      %p56 = scmp.eq.s32.totalorder %s18, 0
      %p57 = por %p55, %p56
      %s58 = ssub.s32 %s19, %s31
      %p59 = scmp.eq.s32.totalorder %s58, 0
      %s61 = sadd.s32 %s60, 1
      %s62 = scalar_select %p59, %s60, %s61
      %p65 = pneg %p59
      %p66 = scmp.eq.s32.totalorder %s12, 3
      %p67 = por %p65, %p66
      %p68 = scmp.ne.s32.totalorder %s60, %s63
      %p69 = scmp.eq.s32.totalorder %s12, 0
      %p70 = por %p68, %p69
      %p71 = scmp.ne.s32.totalorder %s60, %s63
      %p72 = scmp.eq.s32.totalorder %s17, 3
      %p73 = por %p71, %p72
      %p74 = scmp.ne.s32.totalorder %s63, %s64
      %p75 = scmp.eq.s32.totalorder %s17, 0
      %p76 = por %p74, %p75
      %p77 = scmp.ne.s32.totalorder %s63, %s64
      %p78 = scmp.eq.s32.totalorder %s18, 3
      %p79 = por %p77, %p78
      %p81 = scmp.ne.s32.totalorder %s64, %s80
      %p82 = scmp.eq.s32.totalorder %s18, 0
      %p83 = por %p81, %p82
      %s84 = ssub.s32 %s20, %s27
      %p85 = scmp.eq.s32.totalorder %s84, 0
      %s87 = sadd.s32 %s86, 1
      %s88 = scalar_select %p85, %s86, %s87
      %p91 = pneg %p85
      %p92 = scmp.eq.s32.totalorder %s12, 3
      %p93 = por %p91, %p92
      %p94 = scmp.ne.s32.totalorder %s86, %s89
      %p95 = scmp.eq.s32.totalorder %s12, 0
      %p96 = por %p94, %p95
      %p97 = scmp.ne.s32.totalorder %s86, %s89
      %p98 = scmp.eq.s32.totalorder %s17, 3
      %p99 = por %p97, %p98
      %p100 = scmp.ne.s32.totalorder %s89, %s90
      %p101 = scmp.eq.s32.totalorder %s17, 0
      %p102 = por %p100, %p101
      %p103 = scmp.ne.s32.totalorder %s89, %s90
      %p104 = scmp.eq.s32.totalorder %s18, 3
      %p105 = por %p103, %p104
      %p107 = scmp.ne.s32.totalorder %s90, %s106
      %p108 = scmp.eq.s32.totalorder %s18, 0
      %p109 = por %p107, %p108
      %s110 = ssub.s32 %s19, %s31
      %p111 = scmp.eq.s32.totalorder %s110, 0
      %s113 = sadd.s32 %s112, 1
      %s114 = scalar_select %p111, %s112, %s113
      %p117 = pneg %p111
      %p118 = scmp.eq.s32.totalorder %s12, 3
      %p119 = por %p117, %p118
      %p120 = scmp.ne.s32.totalorder %s112, %s115
      %p121 = scmp.eq.s32.totalorder %s12, 0
      %p122 = por %p120, %p121
      %p123 = scmp.ne.s32.totalorder %s112, %s115
      %p124 = scmp.eq.s32.totalorder %s17, 3
      %p125 = por %p123, %p124
      %p126 = scmp.ne.s32.totalorder %s115, %s116
      %p127 = scmp.eq.s32.totalorder %s17, 0
      %p128 = por %p126, %p127
      %p129 = scmp.ne.s32.totalorder %s115, %s116
      %p130 = scmp.eq.s32.totalorder %s18, 3
      %p131 = por %p129, %p130
      %p133 = scmp.ne.s32.totalorder %s116, %s132
      %p134 = scmp.eq.s32.totalorder %s18, 0
      %p135 = por %p133, %p134
      %p136 = scmp.le.s32.totalorder 1, %s12
      %p137 = scmp.lt.s32.totalorder %s12, 5
      %p138 = pnand %p136, %p137
      %p139 = pneg %p138
      // Predicated region
      $region9: #{tpu_custom_call.1} parent=5 // pred_check
        _
      $region10: #{tpu_custom_call.1} parent=5 // pred_check_branch
        %141 = sbr.rel (%p138) target = $region12
      $region11: #{tpu_custom_call.1} parent=5 // pred_region
        %s142 = ssub.s32 %s12, 1
      $region12: #{tpu_custom_call.1} parent=5 // pred_fallthru
        _
      %p143 = scmp.lt.s32.totalorder %s12, 4
      // Predicated region
      $region13: #{tpu_custom_call.1} parent=5 // pred_check
        %p144 = pneg %p143
      $region14: #{tpu_custom_call.1} parent=5 // pred_check_branch
        %146 = sbr.rel (%p144) target = $region16
      $region15: #{tpu_custom_call.1} parent=5 // pred_region
        // Predicated region
        $region17: #{tpu_custom_call.1} parent=15 // pred_check
          %p147 = pneg %p44
        $region18: #{tpu_custom_call.1} parent=15 // pred_check_branch
          %149 = sbr.rel (%p147) target = $region20
        $region19: #{tpu_custom_call.1} parent=15 // pred_region
          %p150 = scmp.lt.s32.totalorder %s19, 1
          %s151 = scalar_select %p150, %s19, 1
          %s152 = smul.addr %s151, 8
          %s153 = scalar_lea.vmem %s0, %s152
        $region20: #{tpu_custom_call.1} parent=15 // pred_fallthru
          _
        // Predicated region
        $region21: #{tpu_custom_call.1} parent=15 // pred_check
          %p154 = pneg %p70
        $region22: #{tpu_custom_call.1} parent=15 // pred_check_branch
          %156 = sbr.rel (%p154) target = $region24
        $region23: #{tpu_custom_call.1} parent=15 // pred_region
          %p157 = scmp.lt.s32.totalorder %s19, 1
          %s158 = scalar_select %p157, %s19, 1
          %s159 = smul.addr %s158, 8
          %s160 = scalar_lea.vmem %s1, %s159
        $region24: #{tpu_custom_call.1} parent=15 // pred_fallthru
          _
        // Predicated region
        $region25: #{tpu_custom_call.1} parent=15 // pred_check
          %p161 = pneg %p96
        $region26: #{tpu_custom_call.1} parent=15 // pred_check_branch
          %163 = sbr.rel (%p161) target = $region28
        $region27: #{tpu_custom_call.1} parent=15 // pred_region
          %s164 = sand.u32 %s86, 1
          %s165 = scalar_lea.sflag [#allocation5], %s164
          %s166 = sand.u32 %s86, 1
          %s167 = smul.addr %s166, 128
          %s168 = scalar_lea.vmem [#allocation4], %s167
          %s169 = smul.u32 16, %s20
          %s171 = ssub.s32 2048, 2048
          %172 = vsyncadd %s165, %s171
          %s173 = smul.addr %s169, 128
          %s174 = scalar_lea.hbm %s2, %s173
          %s175 = sshll.u32 %s168, 4
          %s176 = int_to_ptr.vmem [resolvable:$true] %s175
          %181 = dma.hbm_to_vmem [thread:$0]  %s174, 2048, %s176, %s165, 128, 128, 8
        $region28: #{tpu_custom_call.1} parent=15 // pred_fallthru
          _
      $region16: #{tpu_custom_call.1} parent=5 // pred_fallthru
        _
      %p182 = scmp.le.s32.totalorder 1, %s12
      %p183 = scmp.lt.s32.totalorder %s12, 5
      %p184 = pnand %p182, %p183
      %p185 = pneg %p184
      // Predicated region
      $region29: #{tpu_custom_call.1} parent=5 // pred_check
        _
      $region30: #{tpu_custom_call.1} parent=5 // pred_check_branch
        %187 = sbr.rel (%p184) target = $region32
      $region31: #{tpu_custom_call.1} parent=5 // pred_region
        %s188 = ssub.s32 %s12, 1
        %s189 = sand.u32 %s89, 1
        %s190 = scalar_lea.sflag [#allocation5], %s189
        %s191 = sand.u32 %s89, 1
        %s192 = smul.addr %s191, 128
        %s193 = scalar_lea.vmem [#allocation4], %s192
        // Predicated region
        $region33: #{tpu_custom_call.1} parent=31 // pred_check
          %p194 = pneg %p102
        $region34: #{tpu_custom_call.1} parent=31 // pred_check_branch
          %196 = sbr.rel (%p194) target = $region36
        $region35: #{tpu_custom_call.1} parent=31 // pred_region
          %197 = dma.done %s190, 2048
        $region36: #{tpu_custom_call.1} parent=31 // pred_fallthru
          _
        %p198 = scmp.lt.s32.totalorder %s21, 1
        %s199 = scalar_select %p198, %s21, 1
        %s200 = smul.addr %s199, 8
        %s201 = scalar_lea.vmem %s0, %s200
        %p202 = pneg %p50
        %p203 = pneg %p47
        %p204 = scmp.lt.s32.totalorder %s21, 1
        %s205 = scalar_select %p204, %s21, 1
        %s206 = smul.addr %s205, 8
        %s207 = scalar_lea.vmem %s1, %s206
        %p208 = pneg %p76
        %p209 = pneg %p73
        %s210 = sand.u32 %s89, 1
        %s211 = scalar_lea.sflag [#allocation5], %s210
        %s212 = sand.u32 %s89, 1
        %s213 = smul.addr %s212, 128
        %s214 = scalar_lea.vmem [#allocation4], %s213
        %p215 = pneg %p102
        %p216 = pneg %p99
        %p217 = pneg %p128
        %p218 = pneg %p125
        %p219 = scmp.lt.s32.totalorder %s21, 1
        %s220 = scalar_select %p219, %s21, 1
        %s221 = smul.addr %s220, 8
        %s222 = scalar_lea.vmem %s3, %s221
        %p223 = scmp.lt.s32.totalorder %s21, 1
        %s224 = scalar_select %p223, %s21, 1
        %s225 = smul.addr %s224, 8
        %s226 = scalar_lea.vmem %s0, %s225
        %p227 = scmp.lt.s32.totalorder %s21, 1
        %s228 = scalar_select %p227, %s21, 1
        %s229 = smul.addr %s228, 8
        %s230 = scalar_lea.vmem %s1, %s229
        %s231 = smul.u32 16, %s22
        %p232 = scmp.lt.s32.totalorder %s21, 1
        %s233 = scalar_select %p232, %s21, 1
        %s234 = smul.addr %s233, 8
        %s235 = scalar_lea.vmem %s3, %s234
        %p236 = scmp.eq.s32.totalorder %s22, 0
        // Predicated region
        $region37: #{tpu_custom_call.1} parent=31 // pred_check
          %p237 = pneg %p236
        $region38: #{tpu_custom_call.1} parent=31 // pred_check_branch
          %239 = sbr.rel (%p237) target = $region40
        $region39: #{tpu_custom_call.1} parent=31 // pred_region
          %vm240 = vcmask 7168
          %241 = vst.msk [vmem:[#allocation2] sm:$0xff] %vm240, -inf
          %242 = vst.msk [vmem:[#allocation3] sm:$0xff] %vm240, 0.0
        $region40: #{tpu_custom_call.1} parent=31 // pred_fallthru
          _
        %v243 = vld [vmem:[%s226] sm:$0xff]
        %v244 = vld [vmem:[%s193] sm:$0xff]
        %v245 = vld [vmem:[%s193 + $0x8] sm:$0xff]
        %v246 = vld [vmem:[%s193 + $0x10] sm:$0xff]
        %v247 = vld [vmem:[%s193 + $0x18] sm:$0xff]
        %v248 = vld [vmem:[%s193 + $0x20] sm:$0xff]
        %v249 = vld [vmem:[%s193 + $0x28] sm:$0xff]
        %v250 = vld [vmem:[%s193 + $0x30] sm:$0xff]
        %v251 = vld [vmem:[%s193 + $0x38] sm:$0xff]
        %v252 = vld [vmem:[%s193 + $0x40] sm:$0xff]
        %v253 = vld [vmem:[%s193 + $0x48] sm:$0xff]
        %v254 = vld [vmem:[%s193 + $0x50] sm:$0xff]
        %v255 = vld [vmem:[%s193 + $0x58] sm:$0xff]
        %v256 = vld [vmem:[%s193 + $0x60] sm:$0xff]
        %v257 = vld [vmem:[%s193 + $0x68] sm:$0xff]
        %v258 = vld [vmem:[%s193 + $0x70] sm:$0xff]
        %v259 = vld [vmem:[%s193 + $0x78] sm:$0xff]
        %260 = vmatprep.subr.mxu0 0.0
        %261 = vmatpush1.xpose.msra.mxu0 %v259
        %262 = vmatprep.subr.mxu0 0.0
        %263 = vmatpush1.xpose.msra.mxu0 %v258
        %264 = vmatprep.subr.mxu0 0.0
        %265 = vmatpush1.xpose.msra.mxu0 %v257
        %266 = vmatprep.subr.mxu0 0.0
        %267 = vmatpush1.xpose.msra.mxu0 %v256
        %268 = vmatprep.subr.mxu0 0.0
        %269 = vmatpush1.xpose.msra.mxu0 %v255
        %270 = vmatprep.subr.mxu0 0.0
        %271 = vmatpush1.xpose.msra.mxu0 %v254
        %272 = vmatprep.subr.mxu0 0.0
        %273 = vmatpush1.xpose.msra.mxu0 %v253
        %274 = vmatprep.subr.mxu0 0.0
        %275 = vmatpush1.xpose.msra.mxu0 %v252
        %276 = vmatprep.subr.mxu0 0.0
        %277 = vmatpush1.xpose.msra.mxu0 %v251
        %278 = vmatprep.subr.mxu0 0.0
        %279 = vmatpush1.xpose.msra.mxu0 %v250
        %280 = vmatprep.subr.mxu0 0.0
        %281 = vmatpush1.xpose.msra.mxu0 %v249
        %282 = vmatprep.subr.mxu0 0.0
        %283 = vmatpush1.xpose.msra.mxu0 %v248
        %284 = vmatprep.subr.mxu0 0.0
        %285 = vmatpush1.xpose.msra.mxu0 %v247
        %286 = vmatprep.subr.mxu0 0.0
        %287 = vmatpush1.xpose.msra.mxu0 %v246
        %288 = vmatprep.subr.mxu0 0.0
        %289 = vmatpush1.xpose.msra.mxu0 %v245
        %290 = vmatprep.subr.mxu0 0.0
        %291 = vmatpush1.xpose.msra.mxu0 %v244
        %292 = vmatprep.subr.mxu0 0.0
        %293 = vmatpush2.xpose.msra.mxu0 0.0
        %294 = vmatprep.subr.mxu0 0.0
        %295 = vmatpush2.xpose.msra.mxu0 0.0
        %296 = vmatprep.subr.mxu0 0.0
        %297 = vmatpush2.xpose.msra.mxu0 0.0
        %298 = vmatprep.subr.mxu0 0.0
        %299 = vmatpush2.xpose.msra.mxu0 0.0
        %300 = vmatprep.subr.mxu0 0.0
        %301 = vmatpush2.xpose.msra.mxu0 0.0
        %302 = vmatprep.subr.mxu0 0.0
        %303 = vmatpush2.xpose.msra.mxu0 0.0
        %304 = vmatprep.subr.mxu0 0.0
        %305 = vmatpush2.xpose.msra.mxu0 0.0
        %306 = vmatprep.subr.mxu0 0.0
        %307 = vmatpush2.xpose.msra.mxu0 0.0
        %308 = vmatprep.subr.mxu0 0.0
        %309 = vmatpush2.xpose.msra.mxu0 0.0
        %310 = vmatprep.subr.mxu0 0.0
        %311 = vmatpush2.xpose.msra.mxu0 0.0
        %312 = vmatprep.subr.mxu0 0.0
        %313 = vmatpush2.xpose.msra.mxu0 0.0
        %314 = vmatprep.subr.mxu0 0.0
        %315 = vmatpush2.xpose.msra.mxu0 0.0
        %316 = vmatprep.subr.mxu0 0.0
        %317 = vmatpush2.xpose.msra.mxu0 0.0
        %318 = vmatprep.subr.mxu0 0.0
        %319 = vmatpush2.xpose.msra.mxu0 0.0
        %320 = vmatprep.subr.mxu0 0.0
        %321 = vmatpush2.xpose.msra.mxu0 0.0
        %322 = vmatprep.subr.mxu0 0.0
        %323 = vmatpush2.xpose.msra.mxu0 0.0
        %324 = vmatprep.mubr.f32.mxu0 0.0
        %325 = vmatmul.mubr.f32.gmra.mxu0 %v243
        %v326 = vpop.f32.mrf.mxu0
        %v327 = vadd.f32 0.0, %v326
        %v328 = vpop.f32.mrf.mxu0
        %329 = vdwg.mxu0
        %v330 = vld [vmem:[#allocation2] sm:$0xff]
        %331 = vmax.xlane.f32.xlu0 %v327
        %v332 = vpop.xlane.xlu0 %331
        %v333 = vmax.f32 %v330, %v332
        %v334 = vld [vmem:[#allocation3] sm:$0xff]
        %v335 = vsub.f32 %v330, %v333
        %v336 = vmul.f32 %v335, 1.442695
        %v337 = vpow.pop %v336
        %v338 = vmul.f32 %v334, %v337
        %340 = vset.pattern.permute.xlu0 0
        %341 = vperm.xlu0 %340, %v333
        %v342 = vpop.permute.xlu0 %341
        %v344 = vsub.f32 %v327, %v342
        %v345 = vmul.f32 %v344, 1.442695
        %v346 = vpow.pop %v345
        %347 = vadd.xlane.f32.xlu0 %v346
        %v348 = vpop.xlane.xlu0 %347
        %v349 = vadd.f32 %v338, %v348
        %vm350 = vcmask 7168
        %351 = vst.msk [vmem:[#allocation3] sm:$0xff] %vm350, %v349
        %352 = vst.msk [vmem:[#allocation2] sm:$0xff] %vm350, %v333
        %p353 = scmp.eq.s32.totalorder %s22, 1
        // Predicated region
        $region41: #{tpu_custom_call.1} parent=31 // pred_check
          %p354 = pneg %p353
        $region42: #{tpu_custom_call.1} parent=31 // pred_check_branch
          %356 = sbr.rel (%p354) target = $region44
        $region43: #{tpu_custom_call.1} parent=31 // pred_region
          %v357 = vld [vmem:[#allocation2] sm:$0xff]
          %v358 = vld [vmem:[#allocation3] sm:$0xff]
          %v359 = vlog2.pop %v358
          %v360 = vmul.f32 %v359, 0.6931472
          %v361 = vadd.f32 %v357, %v360
          %v362 = vld [vmem:[%s230] sm:$0xff]
          %v363 = vsub.f32 %v361, %v362
          %364 = vst.msk [vmem:[%s235] sm:$0xff] %vm350, %v363
        $region44: #{tpu_custom_call.1} parent=31 // pred_fallthru
          _
        %p365 = scmp.lt.s32.totalorder %s21, 1
        %s366 = scalar_select %p365, %s21, 1
        %s367 = smul.addr %s366, 8
        %s368 = scalar_lea.vmem %s3, %s367
        // Predicated region
        $region45: #{tpu_custom_call.1} parent=31 // pred_check
          %p369 = pneg %p125
        $region46: #{tpu_custom_call.1} parent=31 // pred_check_branch
          %371 = sbr.rel (%p369) target = $region48
        $region47: #{tpu_custom_call.1} parent=31 // pred_region
          _
        $region48: #{tpu_custom_call.1} parent=31 // pred_fallthru
          _
      $region32: #{tpu_custom_call.1} parent=5 // pred_fallthru
        _
      %p372 = scmp.le.s32.totalorder 2, %s12
      // Predicated region
      $region49: #{tpu_custom_call.1} parent=5 // pred_check
        %p373 = pneg %p372
      $region50: #{tpu_custom_call.1} parent=5 // pred_check_branch
        %375 = sbr.rel (%p373) target = $region52
      $region51: #{tpu_custom_call.1} parent=5 // pred_region
        %s376 = ssub.s32 %s12, 2
        // Predicated region
        $region53: #{tpu_custom_call.1} parent=51 // pred_check
          %p377 = pneg %p131
        $region54: #{tpu_custom_call.1} parent=51 // pred_check_branch
          %379 = sbr.rel (%p377) target = $region56
        $region55: #{tpu_custom_call.1} parent=51 // pred_region
          %p380 = scmp.lt.s32.totalorder %s23, 1
          %s381 = scalar_select %p380, %s23, 1
          %s382 = smul.addr %s381, 8
          %s383 = scalar_lea.vmem %s3, %s382
        $region56: #{tpu_custom_call.1} parent=51 // pred_fallthru
          _
      $region52: #{tpu_custom_call.1} parent=5 // pred_fallthru
        _
    $region6: #{tpu_custom_call.1} parent=1 // loop_footer
      %s16 = sadd.s32 1, %s12
    $region7: #{tpu_custom_call.1} parent=1 // loop_footer_branch
      %11 = sbr.rel target = $region3
    $region8: #{tpu_custom_call.1} parent=1 // loop_exit
      _
    %384 = vsyncpa [#allocation5], 1
    %s385 = scalar_lea.sflag [#allocation5], 1
    %386 = vsyncpa %s385, 1

</llo_original>
